<compile_context>
chip_gen: v6e
topology: v6e:2x2x1
jax: 0.10.0
libtpu: 0.0.40
codegen_flags: <defaults>
</compile_context>

<pallas_src>
import functools

import jax
import jax.numpy as jnp
from jax import lax
from jax.experimental import pallas as pl
from jax.experimental.pallas import tpu as pltpu

BN_EPS = 1e-5
_VMEM_LIMIT = 32 * 1024 * 1024  # fits every generation's scoped VMEM budget


def _round_up(x, m):
    return ((x + m - 1) // m) * m


def _pick_block_s(S, N):
    """Lane-tile width (multiple of 128) along each image's flattened Ho*Wo axis.

    Larger tiles amortize the ~0.35 us fixed per-grid-step overhead (this kernel
    is step-overhead / HBM bound, not compute bound).  Keep >= 4 total tiles so
    v7x's two TensorCores both get pipelined work, and cap zero-padding waste
    at ~12.5%.
    """
    best = 128
    for cand in (256, 512, 1024, 2048, 4096, 8192):
        s_pad = _round_up(S, cand)
        if (s_pad - S) * 8 > s_pad:          # > 12.5% zero-pad waste
            continue
        if N * (s_pad // cand) < 4:          # keep 2 TCs x double-buffer busy
            continue
        best = cand
    return best


def _conv_stats_kernel(a_ref, w_ref, y_ref, stats_ref):
    """Per (image, spatial-tile): conv-as-matmul (lane-dense) + partial BN stats.

    a_ref:     (K, BS)      im2col patches for this tile, M on lanes (ReLU done in glue)
    w_ref:     (C_out, K)   conv weight, K on lanes (resident, tiny)
    y_ref:     (C_out, BS)  pre-BN conv output tile (lane-dense store)
    stats_ref: (C_out, 2)   this tile's [sum, sum-of-squares] over BS columns
    """
    y = jnp.dot(w_ref[...], a_ref[...], preferred_element_type=jnp.float32)  # MXU
    y_ref[...] = y
    # One-pass streaming stats; zero-padded spatial columns contribute exactly 0.
    ssum = jnp.sum(y, axis=1, keepdims=True)
    ssq = jnp.sum(y * y, axis=1, keepdims=True)
    stats_ref[...] = jnp.concatenate([ssum, ssq], axis=-1)  # single store


def _bn_apply_kernel(y_ref, scale_ref, shift_ref, o_ref):
    """Second pass: o = y * scale + shift with folded per-channel BN params."""
    o_ref[...] = y_ref[...] * scale_ref[...] + shift_ref[...]


def conv_forward(x, weight, gamma, beta, *, stride, padding,
                 block_s=None, mxu_dtype=jnp.bfloat16):
    """x: (N, C_in, H, W) f32; weight: (C_out, C_in, k, k) f32. Returns NCHW f32."""
    N, C_in, H, W = x.shape
    C_out, _, k, _ = weight.shape
    H_out = (H + 2 * padding - k) // stride + 1
    W_out = (W + 2 * padding - k) // stride + 1
    S = H_out * W_out            # per-image spatial size
    K = C_in * k * k
    M = N * S                    # true BN element count (padding excluded)

    if block_s is None:
        block_s = _pick_block_s(S, N)
    S_pad = _round_up(S, block_s)
    T = S_pad // block_s

    # ---- glue: ReLU once on x (f32), cast, then im2col in (N, K, S) layout ----
    # (ReLU commutes with patch extraction; doing it pre-cast also avoids any
    #  bf16 VPU issue on v5e.)
    xr = jnp.maximum(x, 0.0).astype(mxu_dtype)
    xp = jnp.pad(xr, ((0, 0), (0, 0), (padding, padding), (padding, padding)))
    taps = jnp.stack(
        [xp[:, :,
            ki:ki + (H_out - 1) * stride + 1:stride,
            kj:kj + (W_out - 1) * stride + 1:stride]
         for ki in range(k) for kj in range(k)],
        axis=2)                                            # (N, C_in, k*k, Ho, Wo)
    a3 = taps.reshape(N, K, S)                             # K order = (C_in, kh, kw)
    a3 = jnp.pad(a3, ((0, 0), (0, 0), (0, S_pad - S)))     # zero cols -> y cols = 0
    w2 = weight.reshape(C_out, K).astype(mxu_dtype)        # same K ordering

    itemsize = jnp.dtype(mxu_dtype).itemsize
    pass1_bytes = ((a3.size + w2.size) * itemsize
                   + (N * C_out * S_pad + N * T * C_out * 2) * 4)

    # ---- pass 1: conv matmul + per-tile partial BN stats (lane-dense) ----
    y3, stats = pl.pallas_call(
        _conv_stats_kernel,
        out_shape=(jax.ShapeDtypeStruct((N, C_out, S_pad), jnp.float32),
                   jax.ShapeDtypeStruct((N, T, C_out, 2), jnp.float32)),
        grid=(N, T),
        in_specs=[
            pl.BlockSpec((None, K, block_s), lambda n, t: (n, 0, t)),
            pl.BlockSpec((C_out, K), lambda n, t: (0, 0)),
        ],
        out_specs=(
            pl.BlockSpec((None, C_out, block_s), lambda n, t: (n, 0, t)),
            pl.BlockSpec((None, None, C_out, 2), lambda n, t: (n, t, 0, 0)),
        ),
        compiler_params=pltpu.CompilerParams(
            dimension_semantics=("parallel", "parallel"),
            vmem_limit_bytes=_VMEM_LIMIT),
        cost_estimate=pl.CostEstimate(
            flops=2 * N * S_pad * K * C_out + 3 * C_out * N * S_pad,
            transcendentals=0,
            bytes_accessed=pass1_bytes),
    )(a3, w2)

    # ---- glue: combine partial stats (tiny), fold BN into scale/shift ----
    totals = jnp.sum(stats, axis=(0, 1))                 # (C_out, 2) global sums
    mean = totals[:, 0] / M                              # true M: padding excluded
    var = totals[:, 1] / M - mean * mean                 # biased var (training-mode BN)
    # TODO(synk): for channels where |mean| >> std, switch to shifted
    # sums-of-squares to avoid f32 cancellation; fine at these magnitudes.
    inv_std = lax.rsqrt(var + BN_EPS)
    scale = (gamma * inv_std).reshape(C_out, 1).astype(jnp.float32)
    shift = (beta - mean * gamma * inv_std).reshape(C_out, 1).astype(jnp.float32)

    # ---- pass 2: lane-dense normalize, writing the final layout directly ----
    out3 = pl.pallas_call(
        _bn_apply_kernel,
        out_shape=jax.ShapeDtypeStruct((N, C_out, S_pad), jnp.float32),
        grid=(N, T),
        in_specs=[
            pl.BlockSpec((None, C_out, block_s), lambda n, t: (n, 0, t)),
            pl.BlockSpec((C_out, 1), lambda n, t: (0, 0)),
            pl.BlockSpec((C_out, 1), lambda n, t: (0, 0)),
        ],
        out_specs=pl.BlockSpec((None, C_out, block_s), lambda n, t: (n, 0, t)),
        compiler_params=pltpu.CompilerParams(
            dimension_semantics=("parallel", "parallel"),
            vmem_limit_bytes=_VMEM_LIMIT),
        cost_estimate=pl.CostEstimate(
            flops=2 * C_out * N * S_pad,
            transcendentals=0,
            bytes_accessed=2 * N * C_out * S_pad * 4 + 2 * C_out * 4),
    )(y3, scale, shift)

    # Already (N, C_out, spatial): slice is a no-op when S_pad == S, reshape is
    # free metadata — no transpose round trip.
    return out3[:, :, :S].reshape(N, C_out, H_out, W_out)


def _reference(x, weight, gamma, beta, *, stride, padding):
    y = lax.conv_general_dilated(
        jnp.maximum(x, 0.0), weight,
        window_strides=(stride, stride),
        padding=((padding, padding), (padding, padding)),
        dimension_numbers=("NCHW", "OIHW", "NCHW"),
    )
    mean = y.mean(axis=(0, 2, 3), keepdims=True)
    var = ((y - mean) ** 2).mean(axis=(0, 2, 3), keepdims=True)
    y_hat = (y - mean) * lax.rsqrt(var + BN_EPS)
    return y_hat * gamma.reshape(1, -1, 1, 1) + beta.reshape(1, -1, 1, 1)


if __name__ == "__main__":
    # Module config: Conv(C_in=4, C_out=8, kernel_size=3, stride=1, padding=1, shape=...)
    C_in, C_out, k, stride, padding = 4, 8, 3, 1, 1
    N, H, W = 2, 16, 16

    key = jax.random.PRNGKey(0)
    kx, kw = jax.random.split(key)
    x = jax.random.normal(kx, (N, C_in, H, W), dtype=jnp.float32)
    weight = 0.1 * jax.random.normal(kw, (C_out, C_in, k, k), dtype=jnp.float32)
    gamma = jnp.ones((C_out,), dtype=jnp.float32)   # PyTorch BN defaults
    beta = jnp.zeros((C_out,), dtype=jnp.float32)

    y_ref = _reference(x, weight, gamma, beta, stride=stride, padding=padding)

    # Default production path: bf16 MXU inputs, f32 accumulate + f32 BN math.
    fwd_bf16 = jax.jit(functools.partial(conv_forward, stride=stride, padding=padding))
    y_bf16 = jax.block_until_ready(fwd_bf16(x, weight, gamma, beta))
    assert y_bf16.shape == (N, C_out, H, W), y_bf16.shape
    assert jnp.allclose(y_bf16, y_ref, rtol=5e-2, atol=5e-2), \
        float(jnp.max(jnp.abs(y_bf16 - y_ref)))

    # f32 MXU path: strict check against the f32 reference.
    fwd_f32 = jax.jit(functools.partial(conv_forward, stride=stride, padding=padding,
                                        mxu_dtype=jnp.float32))
    y_f32 = jax.block_until_ready(fwd_f32(x, weight, gamma, beta))
    assert jnp.allclose(y_f32, y_ref, rtol=1e-3, atol=1e-3), \
        float(jnp.max(jnp.abs(y_f32 - y_ref)))

    print("KERNEL_OK")
</pallas_src>

<mosaic_0001>
module attributes {stable_mosaic.version = 11 : i64} {
  func.func @_conv_stats_kernel(%arg0: i32, %arg1: i32, %arg2: memref<1x36x128xbf16, #tpu.memory_space<vmem>>, %arg3: memref<8x36xbf16, #tpu.memory_space<vmem>>, %arg4: memref<1x8x128xf32, #tpu.memory_space<vmem>>, %arg5: memref<1x1x8x2xf32, #tpu.memory_space<vmem>>) attributes {dimension_semantics = [#tpu.dimension_semantics<parallel>, #tpu.dimension_semantics<parallel>], iteration_bounds = array<i64: 2, 2>, scalar_prefetch = 0 : i64, scratch_operands = 0 : i64, tpu.core_type = #tpu.core_type<tc>, window_params = [{transform_indices = @transform_0, window_bounds = array<i64: 1, 36, 128>}, {pipeline_mode = #tpu.pipeline_mode<synchronous>, transform_indices = @transform_1, window_bounds = array<i64: 8, 36>}, {transform_indices = @transform_2, window_bounds = array<i64: 1, 8, 128>}, {transform_indices = @transform_3, window_bounds = array<i64: 1, 1, 8, 2>}]} {
    %c0 = arith.constant 0 : index
    %c0_0 = arith.constant 0 : index
    %0 = vector.load %arg3[%c0, %c0_0] : memref<8x36xbf16, #tpu.memory_space<vmem>>, vector<8x36xbf16>
    %c0_1 = arith.constant 0 : index
    %c0_2 = arith.constant 0 : index
    %c0_3 = arith.constant 0 : index
    %1 = vector.load %arg2[%c0_1, %c0_2, %c0_3] : memref<1x36x128xbf16, #tpu.memory_space<vmem>>, vector<1x36x128xbf16>
    %2 = vector.shape_cast %1 : vector<1x36x128xbf16> to vector<36x128xbf16>
    %cst = arith.constant dense<0.000000e+00> : vector<8x128xf32>
    %3 = tpu.matmul %0, %2, %cst {dimension_numbers = #tpu.dot_dimension_numbers<[1], [0], [0], [1], [0, 0, 1, 1], [], []>} : vector<8x36xbf16>, vector<36x128xbf16>, vector<8x128xf32> -> vector<8x128xf32>
    %c0_4 = arith.constant 0 : index
    %c0_5 = arith.constant 0 : index
    %c0_6 = arith.constant 0 : index
    %4 = vector.load %arg4[%c0_4, %c0_5, %c0_6] : memref<1x8x128xf32, #tpu.memory_space<vmem>>, vector<1x8x128xf32>
    %5 = vector.shape_cast %4 : vector<1x8x128xf32> to vector<8x128xf32>
    %6 = vector.shape_cast %3 : vector<8x128xf32> to vector<1x8x128xf32>
    tpu.vector_store %arg4[%c0_4, %c0_5, %c0_6], %6 {strides = array<i32>} : memref<1x8x128xf32, #tpu.memory_space<vmem>>, vector<1x8x128xf32>,
    %cst_7 = arith.constant dense<0.000000e+00> : vector<8xf32>
    %7 = vector.multi_reduction <add>, %3, %cst_7 [1] : vector<8x128xf32> to vector<8xf32>
    %8 = vector.shape_cast %7 : vector<8xf32> to vector<8x1xf32>
    %9 = arith.mulf %3, %3 : vector<8x128xf32>
    %cst_8 = arith.constant dense<0.000000e+00> : vector<8xf32>
    %10 = vector.multi_reduction <add>, %9, %cst_8 [1] : vector<8x128xf32> to vector<8xf32>
    %11 = vector.shape_cast %10 : vector<8xf32> to vector<8x1xf32>
    %12 = tpu.concatenate %8, %11 in 1 : vector<8x1xf32>, vector<8x1xf32> -> vector<8x2xf32>
    %c0_9 = arith.constant 0 : index
    %c0_10 = arith.constant 0 : index
    %c0_11 = arith.constant 0 : index
    %c0_12 = arith.constant 0 : index
    %13 = vector.load %arg5[%c0_9, %c0_10, %c0_11, %c0_12] : memref<1x1x8x2xf32, #tpu.memory_space<vmem>>, vector<1x1x8x2xf32>
    %14 = vector.shape_cast %13 : vector<1x1x8x2xf32> to vector<8x2xf32>
    %15 = vector.shape_cast %12 : vector<8x2xf32> to vector<1x1x8x2xf32>
    tpu.vector_store %arg5[%c0_9, %c0_10, %c0_11, %c0_12], %15 {strides = array<i32>} : memref<1x1x8x2xf32, #tpu.memory_space<vmem>>, vector<1x1x8x2xf32>,
    return
  }
  func.func @transform_0(%arg0: i32, %arg1: i32) -> (i32, i32, i32) {
    %c0_i32 = arith.constant 0 : i32
    %c0_i32_0 = arith.constant 0 : i32
    return %arg0, %c0_i32, %arg1 : i32, i32, i32
  }
  func.func @transform_1(%arg0: i32, %arg1: i32) -> (i32, i32) {
    %c0_i32 = arith.constant 0 : i32
    %c0_i32_0 = arith.constant 0 : i32
    %c0_i32_1 = arith.constant 0 : i32
    return %c0_i32, %c0_i32_0 : i32, i32
  }
  func.func @transform_2(%arg0: i32, %arg1: i32) -> (i32, i32, i32) {
    %c0_i32 = arith.constant 0 : i32
    %c0_i32_0 = arith.constant 0 : i32
    return %arg0, %c0_i32, %arg1 : i32, i32, i32
  }
  func.func @transform_3(%arg0: i32, %arg1: i32) -> (i32, i32, i32, i32) {
    %c0_i32 = arith.constant 0 : i32
    %c0_i32_0 = arith.constant 0 : i32
    %c0_i32_1 = arith.constant 0 : i32
    return %arg0, %arg1, %c0_i32, %c0_i32_0 : i32, i32, i32, i32
  }
}

module attributes {stable_mosaic.version = 11 : i64} {
  func.func @_bn_apply_kernel(%arg0: i32, %arg1: i32, %arg2: memref<1x8x128xf32, #tpu.memory_space<vmem>>, %arg3: memref<8x1xf32, #tpu.memory_space<vmem>>, %arg4: memref<8x1xf32, #tpu.memory_space<vmem>>, %arg5: memref<1x8x128xf32, #tpu.memory_space<vmem>>) attributes {dimension_semantics = [#tpu.dimension_semantics<parallel>, #tpu.dimension_semantics<parallel>], iteration_bounds = array<i64: 2, 2>, scalar_prefetch = 0 : i64, scratch_operands = 0 : i64, tpu.core_type = #tpu.core_type<tc>, window_params = [{transform_indices = @transform_0, window_bounds = array<i64: 1, 8, 128>}, {pipeline_mode = #tpu.pipeline_mode<synchronous>, transform_indices = @transform_1, window_bounds = array<i64: 8, 1>}, {pipeline_mode = #tpu.pipeline_mode<synchronous>, transform_indices = @transform_2, window_bounds = array<i64: 8, 1>}, {transform_indices = @transform_3, window_bounds = array<i64: 1, 8, 128>}]} {
    %c0 = arith.constant 0 : index
    %c0_0 = arith.constant 0 : index
    %c0_1 = arith.constant 0 : index
    %0 = vector.load %arg2[%c0, %c0_0, %c0_1] : memref<1x8x128xf32, #tpu.memory_space<vmem>>, vector<1x8x128xf32>
    %1 = vector.shape_cast %0 : vector<1x8x128xf32> to vector<8x128xf32>
    %c0_2 = arith.constant 0 : index
    %c0_3 = arith.constant 0 : index
    %2 = vector.load %arg3[%c0_2, %c0_3] : memref<8x1xf32, #tpu.memory_space<vmem>>, vector<8x1xf32>
    %3 = vector.broadcast %2 : vector<8x1xf32> to vector<8x128xf32>
    %4 = arith.mulf %1, %3 : vector<8x128xf32>
    %c0_4 = arith.constant 0 : index
    %c0_5 = arith.constant 0 : index
    %5 = vector.load %arg4[%c0_4, %c0_5] : memref<8x1xf32, #tpu.memory_space<vmem>>, vector<8x1xf32>
    %6 = vector.broadcast %5 : vector<8x1xf32> to vector<8x128xf32>
    %7 = arith.addf %4, %6 : vector<8x128xf32>
    %c0_6 = arith.constant 0 : index
    %c0_7 = arith.constant 0 : index
    %c0_8 = arith.constant 0 : index
    %8 = vector.load %arg5[%c0_6, %c0_7, %c0_8] : memref<1x8x128xf32, #tpu.memory_space<vmem>>, vector<1x8x128xf32>
    %9 = vector.shape_cast %8 : vector<1x8x128xf32> to vector<8x128xf32>
    %10 = vector.shape_cast %7 : vector<8x128xf32> to vector<1x8x128xf32>
    tpu.vector_store %arg5[%c0_6, %c0_7, %c0_8], %10 {strides = array<i32>} : memref<1x8x128xf32, #tpu.memory_space<vmem>>, vector<1x8x128xf32>,
    return
  }
  func.func @transform_0(%arg0: i32, %arg1: i32) -> (i32, i32, i32) {
    %c0_i32 = arith.constant 0 : i32
    %c0_i32_0 = arith.constant 0 : i32
    return %arg0, %c0_i32, %arg1 : i32, i32, i32
  }
  func.func @transform_1(%arg0: i32, %arg1: i32) -> (i32, i32) {
    %c0_i32 = arith.constant 0 : i32
    %c0_i32_0 = arith.constant 0 : i32
    %c0_i32_1 = arith.constant 0 : i32
    return %c0_i32, %c0_i32_0 : i32, i32
  }
  func.func @transform_2(%arg0: i32, %arg1: i32) -> (i32, i32) {
    %c0_i32 = arith.constant 0 : i32
    %c0_i32_0 = arith.constant 0 : i32
    %c0_i32_1 = arith.constant 0 : i32
    return %c0_i32, %c0_i32_0 : i32, i32
  }
  func.func @transform_3(%arg0: i32, %arg1: i32) -> (i32, i32, i32) {
    %c0_i32 = arith.constant 0 : i32
    %c0_i32_0 = arith.constant 0 : i32
    return %arg0, %c0_i32, %arg1 : i32, i32, i32
  }
}

</mosaic_0001>

<llo_original>
// kernel: conv_forward.3
$region0: #{conv_forward.3}
  #allocation0 [shape = 'u32[]', space=smem, size = 0x4, offset = 0x4, fixed_abs, tag = 'smem constant byte address 0x4 - core index']
  #allocation1 [shape = 'u32[144,128]{1,0:T(1,128)}', space=vmem, size = 0x12000, scoped, tag = 'internal scratch']
  %s0 = inlined_call_operand.vmem [shape: f32[2,8,256], index: 0, kind: input, shape index: {}]
  %s1 = inlined_call_operand.vmem [shape: f32[8,1], index: 1, kind: input, shape index: {}]
  %s2 = inlined_call_operand.vmem [shape: f32[8,1], index: 2, kind: input, shape index: {}]
  %s3 = inlined_call_operand.vmem [shape: f32[2,8,256], index: 3, kind: output, shape index: {}]
  %s4 = sld [smem:[#allocation0]]
  $region45: #{conv_forward.3} parent=0
    _
  %s6 = ssub.s32 1, %s4
  %s7 = scalar_select 0, %s6, %s4
  loop: start=0, step=1, limit=6
  $region2: #{conv_forward.3} parent=0 // loop_pre_header
    _
  $region3: #{conv_forward.3} parent=0 // loop_header
    %s9 = sphi 0, %s13
    %p10 = scmp.ge.s32.totalorder %s9, 6
    %s16 = sphi 0, %s28
    %s17 = sphi 0, %s24
    %s18 = sphi 0, %s16
    %s19 = sphi 0, %s17
    %s20 = sphi 0, %s18
    %s21 = sphi 0, %s19
    %s33 = sphi 0, %s35
    %s36 = sphi 0, %s33
    %s37 = sphi 0, %s36
    %s53 = sphi 0, %s37
    %s57 = sphi 0, %s57
    %s59 = sphi 0, %s57
    %s60 = sphi 0, %s59
    %s74 = sphi 0, %s60
    %s78 = sphi 0, %s78
    %s80 = sphi 0, %s78
    %s81 = sphi 0, %s80
    %s95 = sphi 0, %s81
    %s103 = sphi 0, %s105
    %s106 = sphi 0, %s103
    %s107 = sphi 0, %s106
    %s123 = sphi 0, %s107
  $region4: #{conv_forward.3} parent=0 // loop_header_branch
    %12 = sbr.rel (%p10) target = $region8
  $region5: #{conv_forward.3} parent=0 // loop_body
    %s14 = ssub.s32 %s9, 1
    %s15 = ssub.s32 %s9, 2
    %s22 = sadd.s32 1, %s17
    %p23 = scmp.ge.s32.totalorder %s22, 2
    %s24 = scalar_select %p23, 0, %s22
    %s25 = sadd.s32 1, %s16
    %s26 = scalar_select %p23, %s25, %s16
    %p27 = scmp.ge.s32.totalorder %s26, 2
    %s28 = scalar_select %p27, 0, %s26
    %s29 = ssub.s32 %s16, %s28
    %s30 = ssub.s32 %s17, %s24
    %s31 = sor.u32 %s29, %s30
    %p32 = scmp.eq.s32.totalorder %s31, 0
    %s34 = sadd.s32 %s33, 1
    %s35 = scalar_select %p32, %s33, %s34
    %p38 = pneg %p32
    %p39 = scmp.eq.s32.totalorder %s9, 3
    %p40 = por %p38, %p39
    %p41 = scmp.ne.s32.totalorder %s33, %s36
    %p42 = scmp.eq.s32.totalorder %s9, 0
    %p43 = por %p41, %p42
    %p44 = scmp.ne.s32.totalorder %s33, %s36
    %p45 = scmp.eq.s32.totalorder %s14, 3
    %p46 = por %p44, %p45
    %p47 = scmp.ne.s32.totalorder %s36, %s37
    %p48 = scmp.eq.s32.totalorder %s14, 0
    %p49 = por %p47, %p48
    %p50 = scmp.ne.s32.totalorder %s36, %s37
    %p51 = scmp.eq.s32.totalorder %s15, 3
    %p52 = por %p50, %p51
    %p54 = scmp.ne.s32.totalorder %s37, %s53
    %p55 = scmp.eq.s32.totalorder %s15, 0
    %p56 = por %p54, %p55
    %s58 = sadd.s32 %s57, 1
    %p61 = scmp.eq.s32.totalorder %s9, 3
    %p62 = scmp.ne.s32.totalorder %s57, %s59
    %p63 = scmp.eq.s32.totalorder %s9, 0
    %p64 = por %p62, %p63
    %p65 = scmp.ne.s32.totalorder %s57, %s59
    %p66 = scmp.eq.s32.totalorder %s14, 3
    %p67 = por %p65, %p66
    %p68 = scmp.ne.s32.totalorder %s59, %s60
    %p69 = scmp.eq.s32.totalorder %s14, 0
    %p70 = por %p68, %p69
    %p71 = scmp.ne.s32.totalorder %s59, %s60
    %p72 = scmp.eq.s32.totalorder %s15, 3
    %p73 = por %p71, %p72
    %p75 = scmp.ne.s32.totalorder %s60, %s74
    %p76 = scmp.eq.s32.totalorder %s15, 0
    %p77 = por %p75, %p76
    %s79 = sadd.s32 %s78, 1
    %p82 = scmp.eq.s32.totalorder %s9, 3
    %p83 = scmp.ne.s32.totalorder %s78, %s80
    %p84 = scmp.eq.s32.totalorder %s9, 0
    %p85 = por %p83, %p84
    %p86 = scmp.ne.s32.totalorder %s78, %s80
    %p87 = scmp.eq.s32.totalorder %s14, 3
    %p88 = por %p86, %p87
    %p89 = scmp.ne.s32.totalorder %s80, %s81
    %p90 = scmp.eq.s32.totalorder %s14, 0
    %p91 = por %p89, %p90
    %p92 = scmp.ne.s32.totalorder %s80, %s81
    %p93 = scmp.eq.s32.totalorder %s15, 3
    %p94 = por %p92, %p93
    %p96 = scmp.ne.s32.totalorder %s81, %s95
    %p97 = scmp.eq.s32.totalorder %s15, 0
    %p98 = por %p96, %p97
    %s99 = ssub.s32 %s16, %s28
    %s100 = ssub.s32 %s17, %s24
    %s101 = sor.u32 %s99, %s100
    %p102 = scmp.eq.s32.totalorder %s101, 0
    %s104 = sadd.s32 %s103, 1
    %s105 = scalar_select %p102, %s103, %s104
    %p108 = pneg %p102
    %p109 = scmp.eq.s32.totalorder %s9, 3
    %p110 = por %p108, %p109
    %p111 = scmp.ne.s32.totalorder %s103, %s106
    %p112 = scmp.eq.s32.totalorder %s9, 0
    %p113 = por %p111, %p112
    %p114 = scmp.ne.s32.totalorder %s103, %s106
    %p115 = scmp.eq.s32.totalorder %s14, 3
    %p116 = por %p114, %p115
    %p117 = scmp.ne.s32.totalorder %s106, %s107
    %p118 = scmp.eq.s32.totalorder %s14, 0
    %p119 = por %p117, %p118
    %p120 = scmp.ne.s32.totalorder %s106, %s107
    %p121 = scmp.eq.s32.totalorder %s15, 3
    %p122 = por %p120, %p121
    %p124 = scmp.ne.s32.totalorder %s107, %s123
    %p125 = scmp.eq.s32.totalorder %s15, 0
    %p126 = por %p124, %p125
    %p127 = scmp.le.s32.totalorder 1, %s9
    %p128 = scmp.lt.s32.totalorder %s9, 5
    %p129 = pnand %p127, %p128
    %p130 = pneg %p129
    // Predicated region
    $region9: #{conv_forward.3} parent=5 // pred_check
      _
    $region10: #{conv_forward.3} parent=5 // pred_check_branch
      %132 = sbr.rel (%p129) target = $region12
    $region11: #{conv_forward.3} parent=5 // pred_region
      %s133 = ssub.s32 %s9, 1
      // Predicated region
      $region13: #{conv_forward.3} parent=11 // pred_check
        %p134 = pneg %p70
      $region14: #{conv_forward.3} parent=11 // pred_check_branch
        %136 = sbr.rel (%p134) target = $region16
      $region15: #{conv_forward.3} parent=11 // pred_region
        _
      $region16: #{conv_forward.3} parent=11 // pred_fallthru
        _
      // Predicated region
      $region17: #{conv_forward.3} parent=11 // pred_check
        %p137 = pneg %p91
      $region18: #{conv_forward.3} parent=11 // pred_check_branch
        %139 = sbr.rel (%p137) target = $region20
      $region19: #{conv_forward.3} parent=11 // pred_region
        _
      $region20: #{conv_forward.3} parent=11 // pred_fallthru
        _
    $region12: #{conv_forward.3} parent=5 // pred_fallthru
      _
    %p140 = scmp.lt.s32.totalorder %s9, 4
    // Predicated region
    $region21: #{conv_forward.3} parent=5 // pred_check
      %p141 = pneg %p140
    $region22: #{conv_forward.3} parent=5 // pred_check_branch
      %143 = sbr.rel (%p141) target = $region24
    $region23: #{conv_forward.3} parent=5 // pred_region
      // Predicated region
      $region25: #{conv_forward.3} parent=23 // pred_check
        %p144 = pneg %p43
      $region26: #{conv_forward.3} parent=23 // pred_check_branch
        %146 = sbr.rel (%p144) target = $region28
      $region27: #{conv_forward.3} parent=23 // pred_region
        %p147 = scmp.lt.s32.totalorder %s16, 1
        %s148 = scalar_select %p147, %s16, 1
        %p149 = scmp.lt.s32.totalorder %s17, 1
        %s150 = scalar_select %p149, %s17, 1
        %s151 = smul.addr %s148, 2
        %s152 = sadd.s32 %s150, %s151
        %s153 = smul.addr %s152, 8
        %s154 = scalar_lea.vmem %s0, %s153
      $region28: #{conv_forward.3} parent=23 // pred_fallthru
        _
    $region24: #{conv_forward.3} parent=5 // pred_fallthru
      _
    %p155 = scmp.le.s32.totalorder 1, %s9
    %p156 = scmp.lt.s32.totalorder %s9, 5
    %p157 = pnand %p155, %p156
    %p158 = pneg %p157
    // Predicated region
    $region29: #{conv_forward.3} parent=5 // pred_check
      _
    $region30: #{conv_forward.3} parent=5 // pred_check_branch
      %160 = sbr.rel (%p157) target = $region32
    $region31: #{conv_forward.3} parent=5 // pred_region
      %s161 = ssub.s32 %s9, 1
      %p162 = scmp.lt.s32.totalorder %s18, 1
      %s163 = scalar_select %p162, %s18, 1
      %p164 = scmp.lt.s32.totalorder %s19, 1
      %s165 = scalar_select %p164, %s19, 1
      %s166 = smul.addr %s163, 2
      %s167 = sadd.s32 %s165, %s166
      %s168 = smul.addr %s167, 8
      %s169 = scalar_lea.vmem %s0, %s168
      %p170 = pneg %p49
      %p171 = pneg %p46
      %p172 = pneg %p70
      %p173 = pneg %p67
      %p174 = pneg %p91
      %p175 = pneg %p88
      %p176 = pneg %p119
      %p177 = pneg %p116
      %p178 = scmp.lt.s32.totalorder %s18, 1
      %s179 = scalar_select %p178, %s18, 1
      %p180 = scmp.lt.s32.totalorder %s19, 1
      %s181 = scalar_select %p180, %s19, 1
      %s182 = smul.addr %s179, 2
      %s183 = sadd.s32 %s181, %s182
      %s184 = smul.addr %s183, 8
      %s185 = scalar_lea.vmem %s3, %s184
      %p186 = scmp.lt.s32.totalorder %s18, 1
      %s187 = scalar_select %p186, %s18, 1
      %p188 = scmp.lt.s32.totalorder %s19, 1
      %s189 = scalar_select %p188, %s19, 1
      %s190 = smul.addr %s187, 2
      %s191 = sadd.s32 %s189, %s190
      %s192 = smul.addr %s191, 8
      %s193 = scalar_lea.vmem %s0, %s192
      %p194 = scmp.lt.s32.totalorder %s18, 1
      %s195 = scalar_select %p194, %s18, 1
      %p196 = scmp.lt.s32.totalorder %s19, 1
      %s197 = scalar_select %p196, %s19, 1
      %s198 = smul.addr %s195, 2
      %s199 = sadd.s32 %s197, %s198
      %s200 = smul.addr %s199, 8
      %s201 = scalar_lea.vmem %s3, %s200
      %v202 = vld [vmem:[%s193] sm:$0xff]
      %v203 = vld [vmem:[%s1] sm:$0xff]
      %205 = vset.pattern.permute.xlu0 0
      %206 = vperm.xlu0 %205, %v203
      %v207 = vpop.permute.xlu0 %206
      %v209 = vmul.f32 %v202, %v207
      %v210 = vld [vmem:[%s2] sm:$0xff]
      %212 = vset.pattern.permute.xlu0 0
      %213 = vperm.xlu0 %212, %v210
      %v214 = vpop.permute.xlu0 %213
      %v216 = vadd.f32 %v209, %v214
      %217 = vst [vmem:[%s201] sm:$0xff] %v216
      %p218 = scmp.lt.s32.totalorder %s18, 1
      %s219 = scalar_select %p218, %s18, 1
      %p220 = scmp.lt.s32.totalorder %s19, 1
      %s221 = scalar_select %p220, %s19, 1
      %s222 = smul.addr %s219, 2
      %s223 = sadd.s32 %s221, %s222
      %s224 = smul.addr %s223, 8
      %s225 = scalar_lea.vmem %s3, %s224
      // Predicated region
      $region33: #{conv_forward.3} parent=31 // pred_check
        %p226 = pneg %p116
      $region34: #{conv_forward.3} parent=31 // pred_check_branch
        %228 = sbr.rel (%p226) target = $region36
      $region35: #{conv_forward.3} parent=31 // pred_region
        _
      $region36: #{conv_forward.3} parent=31 // pred_fallthru
        _
    $region32: #{conv_forward.3} parent=5 // pred_fallthru
      _
    %p229 = scmp.le.s32.totalorder 2, %s9
    // Predicated region
    $region37: #{conv_forward.3} parent=5 // pred_check
      %p230 = pneg %p229
    $region38: #{conv_forward.3} parent=5 // pred_check_branch
      %232 = sbr.rel (%p230) target = $region40
    $region39: #{conv_forward.3} parent=5 // pred_region
      %s233 = ssub.s32 %s9, 2
      // Predicated region
      $region41: #{conv_forward.3} parent=39 // pred_check
        %p234 = pneg %p122
      $region42: #{conv_forward.3} parent=39 // pred_check_branch
        %236 = sbr.rel (%p234) target = $region44
      $region43: #{conv_forward.3} parent=39 // pred_region
        %p237 = scmp.lt.s32.totalorder %s20, 1
        %s238 = scalar_select %p237, %s20, 1
        %p239 = scmp.lt.s32.totalorder %s21, 1
        %s240 = scalar_select %p239, %s21, 1
        %s241 = smul.addr %s238, 2
        %s242 = sadd.s32 %s240, %s241
        %s243 = smul.addr %s242, 8
        %s244 = scalar_lea.vmem %s3, %s243
      $region44: #{conv_forward.3} parent=39 // pred_fallthru
        _
    $region40: #{conv_forward.3} parent=5 // pred_fallthru
      _
  $region6: #{conv_forward.3} parent=0 // loop_footer
    %s13 = sadd.s32 1, %s9
  $region7: #{conv_forward.3} parent=0 // loop_footer_branch
    %8 = sbr.rel target = $region3
  $region8: #{conv_forward.3} parent=0 // loop_exit
    _

// kernel: conv_forward.2
$region0: #{conv_forward.2}
  #allocation0 [shape = 'u32[]', space=smem, size = 0x4, offset = 0x4, fixed_abs, tag = 'smem constant byte address 0x4 - core index']
  #allocation1 [shape = 'u32[144,128]{1,0:T(1,128)}', space=vmem, size = 0x12000, scoped, tag = 'internal scratch']
  %s0 = inlined_call_operand.vmem [shape: bf16[2,36,256], index: 0, kind: input, shape index: {}]
  %s1 = inlined_call_operand.vmem [shape: bf16[8,36], index: 1, kind: input, shape index: {}]
  %s2 = inlined_call_operand.vmem [shape: f32[2,8,256], index: 2, kind: output, shape index: {0}]
  %s3 = inlined_call_operand.vmem [shape: f32[2,2,8,2], index: 3, kind: output, shape index: {1}]
  %4 = xla_tuple %s2, %s3
  %s5 = sld [smem:[#allocation0]]
  $region90: #{conv_forward.2} parent=0
    _
  %s7 = ssub.s32 1, %s5
  %s8 = scalar_select 0, %s7, %s5
  $region1: #{conv_forward.2} parent=0
    #allocation2 [shape = 'u8[20480]{0}', space=vmem, size = 0x5000, scoped, tag = 'input window, operand 0']
    loop: start=0, step=1, limit=6
    $region2: #{conv_forward.2} parent=1 // loop_pre_header
      _
    $region3: #{conv_forward.2} parent=1 // loop_header
      %s10 = sphi 0, %s14
      %p11 = scmp.ge.s32.totalorder %s10, 6
      %s17 = sphi 0, %s29
      %s18 = sphi 0, %s25
      %s19 = sphi 0, %s17
      %s20 = sphi 0, %s18
      %s21 = sphi 0, %s19
      %s22 = sphi 0, %s20
      %s34 = sphi 0, %s36
      %s37 = sphi 0, %s34
      %s38 = sphi 0, %s37
      %s54 = sphi 0, %s38
      %s58 = sphi 0, %s58
      %s60 = sphi 0, %s58
      %s61 = sphi 0, %s60
      %s75 = sphi 0, %s61
      %s83 = sphi 0, %s85
      %s86 = sphi 0, %s83
      %s87 = sphi 0, %s86
      %s103 = sphi 0, %s87
      %s111 = sphi 0, %s113
      %s114 = sphi 0, %s111
      %s115 = sphi 0, %s114
      %s131 = sphi 0, %s115
    $region4: #{conv_forward.2} parent=1 // loop_header_branch
      %13 = sbr.rel (%p11) target = $region8
    $region5: #{conv_forward.2} parent=1 // loop_body
      %s15 = ssub.s32 %s10, 1
      %s16 = ssub.s32 %s10, 2
      %s23 = sadd.s32 1, %s18
      %p24 = scmp.ge.s32.totalorder %s23, 2
      %s25 = scalar_select %p24, 0, %s23
      %s26 = sadd.s32 1, %s17
      %s27 = scalar_select %p24, %s26, %s17
      %p28 = scmp.ge.s32.totalorder %s27, 2
      %s29 = scalar_select %p28, 0, %s27
      %s30 = ssub.s32 %s17, %s29
      %s31 = ssub.s32 %s18, %s25
      %s32 = sor.u32 %s30, %s31
      %p33 = scmp.eq.s32.totalorder %s32, 0
      %s35 = sadd.s32 %s34, 1
      %s36 = scalar_select %p33, %s34, %s35
      %p39 = pneg %p33
      %p40 = scmp.eq.s32.totalorder %s10, 3
      %p41 = por %p39, %p40
      %p42 = scmp.ne.s32.totalorder %s34, %s37
      %p43 = scmp.eq.s32.totalorder %s10, 0
      %p44 = por %p42, %p43
      %p45 = scmp.ne.s32.totalorder %s34, %s37
      %p46 = scmp.eq.s32.totalorder %s15, 3
      %p47 = por %p45, %p46
      %p48 = scmp.ne.s32.totalorder %s37, %s38
      %p49 = scmp.eq.s32.totalorder %s15, 0
      %p50 = por %p48, %p49
      %p51 = scmp.ne.s32.totalorder %s37, %s38
      %p52 = scmp.eq.s32.totalorder %s16, 3
      %p53 = por %p51, %p52
      %p55 = scmp.ne.s32.totalorder %s38, %s54
      %p56 = scmp.eq.s32.totalorder %s16, 0
      %p57 = por %p55, %p56
      %s59 = sadd.s32 %s58, 1
      %p62 = scmp.eq.s32.totalorder %s10, 3
      %p63 = scmp.ne.s32.totalorder %s58, %s60
      %p64 = scmp.eq.s32.totalorder %s10, 0
      %p65 = por %p63, %p64
      %p66 = scmp.ne.s32.totalorder %s58, %s60
      %p67 = scmp.eq.s32.totalorder %s15, 3
      %p68 = por %p66, %p67
      %p69 = scmp.ne.s32.totalorder %s60, %s61
      %p70 = scmp.eq.s32.totalorder %s15, 0
      %p71 = por %p69, %p70
      %p72 = scmp.ne.s32.totalorder %s60, %s61
      %p73 = scmp.eq.s32.totalorder %s16, 3
      %p74 = por %p72, %p73
      %p76 = scmp.ne.s32.totalorder %s61, %s75
      %p77 = scmp.eq.s32.totalorder %s16, 0
      %p78 = por %p76, %p77
      %s79 = ssub.s32 %s17, %s29
      %s80 = ssub.s32 %s18, %s25
      %s81 = sor.u32 %s79, %s80
      %p82 = scmp.eq.s32.totalorder %s81, 0
      %s84 = sadd.s32 %s83, 1
      %s85 = scalar_select %p82, %s83, %s84
      %p88 = pneg %p82
      %p89 = scmp.eq.s32.totalorder %s10, 3
      %p90 = por %p88, %p89
      %p91 = scmp.ne.s32.totalorder %s83, %s86
      %p92 = scmp.eq.s32.totalorder %s10, 0
      %p93 = por %p91, %p92
      %p94 = scmp.ne.s32.totalorder %s83, %s86
      %p95 = scmp.eq.s32.totalorder %s15, 3
      %p96 = por %p94, %p95
      %p97 = scmp.ne.s32.totalorder %s86, %s87
      %p98 = scmp.eq.s32.totalorder %s15, 0
      %p99 = por %p97, %p98
      %p100 = scmp.ne.s32.totalorder %s86, %s87
      %p101 = scmp.eq.s32.totalorder %s16, 3
      %p102 = por %p100, %p101
      %p104 = scmp.ne.s32.totalorder %s87, %s103
      %p105 = scmp.eq.s32.totalorder %s16, 0
      %p106 = por %p104, %p105
      %s107 = ssub.s32 %s17, %s29
      %s108 = ssub.s32 %s18, %s25
      %s109 = sor.u32 %s107, %s108
      %p110 = scmp.eq.s32.totalorder %s109, 0
      %s112 = sadd.s32 %s111, 1
      %s113 = scalar_select %p110, %s111, %s112
      %p116 = pneg %p110
      %p117 = scmp.eq.s32.totalorder %s10, 3
      %p118 = por %p116, %p117
      %p119 = scmp.ne.s32.totalorder %s111, %s114
      %p120 = scmp.eq.s32.totalorder %s10, 0
      %p121 = por %p119, %p120
      %p122 = scmp.ne.s32.totalorder %s111, %s114
      %p123 = scmp.eq.s32.totalorder %s15, 3
      %p124 = por %p122, %p123
      %p125 = scmp.ne.s32.totalorder %s114, %s115
      %p126 = scmp.eq.s32.totalorder %s15, 0
      %p127 = por %p125, %p126
      %p128 = scmp.ne.s32.totalorder %s114, %s115
      %p129 = scmp.eq.s32.totalorder %s16, 3
      %p130 = por %p128, %p129
      %p132 = scmp.ne.s32.totalorder %s115, %s131
      %p133 = scmp.eq.s32.totalorder %s16, 0
      %p134 = por %p132, %p133
      %p135 = scmp.le.s32.totalorder 1, %s10
      %p136 = scmp.lt.s32.totalorder %s10, 5
      %p137 = pnand %p135, %p136
      %p138 = pneg %p137
      // Predicated region
      $region9: #{conv_forward.2} parent=5 // pred_check
        _
      $region10: #{conv_forward.2} parent=5 // pred_check_branch
        %140 = sbr.rel (%p137) target = $region12
      $region11: #{conv_forward.2} parent=5 // pred_region
        %s141 = ssub.s32 %s10, 1
        // Predicated region
        $region13: #{conv_forward.2} parent=11 // pred_check
          %p142 = pneg %p71
        $region14: #{conv_forward.2} parent=11 // pred_check_branch
          %144 = sbr.rel (%p142) target = $region16
        $region15: #{conv_forward.2} parent=11 // pred_region
          _
        $region16: #{conv_forward.2} parent=11 // pred_fallthru
          _
      $region12: #{conv_forward.2} parent=5 // pred_fallthru
        _
      %p145 = scmp.lt.s32.totalorder %s10, 4
      // Predicated region
      $region17: #{conv_forward.2} parent=5 // pred_check
        %p146 = pneg %p145
      $region18: #{conv_forward.2} parent=5 // pred_check_branch
        %148 = sbr.rel (%p146) target = $region20
      $region19: #{conv_forward.2} parent=5 // pred_region
        // Predicated region
        $region21: #{conv_forward.2} parent=19 // pred_check
          %p149 = pneg %p44
        $region22: #{conv_forward.2} parent=19 // pred_check_branch
          %151 = sbr.rel (%p149) target = $region24
        $region23: #{conv_forward.2} parent=19 // pred_region
          %s152 = sand.u32 %s34, 1
          %s153 = sand.u32 %s34, 1
          %s154 = smul.addr %s153, 20
          %s155 = scalar_lea.vmem [#allocation2], %s154
          %s156 = smul.addr %s17, 10
          %s157 = sadd.s32 %s18, %s156
          %s158 = smul.addr %s157, 4
          %s159 = scalar_lea.vmem %s0, %s158
          // Predicated region
          $region25: #{conv_forward.2} parent=23 // pred_check
            _
          $region26: #{conv_forward.2} parent=23 // pred_check_branch
            %161 = sbr.rel (0) target = $region28
          $region27: #{conv_forward.2} parent=23 // pred_region
            // Predicated region
            $region29: #{conv_forward.2} parent=27 // pred_check
              _
            $region30: #{conv_forward.2} parent=27 // pred_check_branch
              %163 = sbr.rel target = $region32
            $region31: #{conv_forward.2} parent=27 // pred_region
              // Predicated region
              $region44: #{conv_forward.2} parent=31 // pred_check
                _
              $region45: #{conv_forward.2} parent=31 // pred_check_branch
                %187 = sbr.rel (0) target = $region47
              $region46: #{conv_forward.2} parent=31 // pred_region
                loop: start=0, step=1, limit=1
                $region48: #{conv_forward.2} parent=46 // loop_pre_header
                  _
                $region49: #{conv_forward.2} parent=46 // loop_header
                  %s189 = sphi 0, %s193
                  %p190 = scmp.ge.s32.totalorder %s189, 1
                  %s194 = sphi %s159, %s159
                  %s195 = sphi %s155, %s155
                $region50: #{conv_forward.2} parent=46 // loop_header_branch
                  %192 = sbr.rel (%p190) target = $region54
                $region51: #{conv_forward.2} parent=46 // loop_body
                  _
                $region52: #{conv_forward.2} parent=46 // loop_footer
                  %s193 = sadd.s32 1, %s189
                $region53: #{conv_forward.2} parent=46 // loop_footer_branch
                  %188 = sbr.rel target = $region49
                $region54: #{conv_forward.2} parent=46 // loop_exit
                  _
                %s197 = ssub.s32 16, 1
                loop: start=0, step=1, limit=1
                $region55: #{conv_forward.2} parent=46 // loop_pre_header
                  _
                $region56: #{conv_forward.2} parent=46 // loop_header
                  %s199 = sphi 0, %s203
                  %p200 = scmp.ge.s32.totalorder %s199, 1
                  %s204 = sphi %s159, %s159
                  %s205 = sphi %s155, %s155
                $region57: #{conv_forward.2} parent=46 // loop_header_branch
                  %202 = sbr.rel (%p200) target = $region61
                $region58: #{conv_forward.2} parent=46 // loop_body
                  %v206 = vld [vmem:[%s204] sm:%s197]
                  %207 = vst [vmem:[%s205] sm:%s197] %v206
                  %v208 = vld [vmem:[%s204 + $0x8] sm:%s197]
                  %209 = vst [vmem:[%s205 + $0x4] sm:%s197] %v208
                  %v210 = vld [vmem:[%s204 + $0x10] sm:%s197]
                  %211 = vst [vmem:[%s205 + $0x8] sm:%s197] %v210
                  %v212 = vld [vmem:[%s204 + $0x18] sm:%s197]
                  %213 = vst [vmem:[%s205 + $0xc] sm:%s197] %v212
                  %v214 = vld [vmem:[%s204 + $0x20] sm:%s197]
                  %215 = vst [vmem:[%s205 + $0x10] sm:%s197] %v214
                $region59: #{conv_forward.2} parent=46 // loop_footer
                  %s203 = sadd.s32 1, %s199
                $region60: #{conv_forward.2} parent=46 // loop_footer_branch
                  %198 = sbr.rel target = $region56
                $region61: #{conv_forward.2} parent=46 // loop_exit
                  _
              $region47: #{conv_forward.2} parent=31 // pred_fallthru
                _
            $region32: #{conv_forward.2} parent=27 // pred_fallthru
              _
            // Predicated region
            $region33: #{conv_forward.2} parent=27 // pred_check
              _
            $region34: #{conv_forward.2} parent=27 // pred_check_branch
              %165 = sbr.rel (0) target = $region36
            $region35: #{conv_forward.2} parent=27 // pred_region
              %s167 = ssub.s32 16, 1
              loop: start=0, step=1, limit=1
              $region37: #{conv_forward.2} parent=35 // loop_pre_header
                _
              $region38: #{conv_forward.2} parent=35 // loop_header
                %s169 = sphi 0, %s173
                %p170 = scmp.ge.s32.totalorder %s169, 1
                %s174 = sphi %s159, %s159
                %s175 = sphi %s155, %s155
              $region39: #{conv_forward.2} parent=35 // loop_header_branch
                %172 = sbr.rel (%p170) target = $region43
              $region40: #{conv_forward.2} parent=35 // loop_body
                %v176 = vld [vmem:[%s174] sm:%s167]
                %177 = vst [vmem:[%s175] sm:%s167] %v176
                %v178 = vld [vmem:[%s174 + $0x8] sm:%s167]
                %179 = vst [vmem:[%s175 + $0x4] sm:%s167] %v178
                %v180 = vld [vmem:[%s174 + $0x10] sm:%s167]
                %181 = vst [vmem:[%s175 + $0x8] sm:%s167] %v180
                %v182 = vld [vmem:[%s174 + $0x18] sm:%s167]
                %183 = vst [vmem:[%s175 + $0xc] sm:%s167] %v182
                %v184 = vld [vmem:[%s174 + $0x20] sm:%s167]
                %185 = vst [vmem:[%s175 + $0x10] sm:%s167] %v184
              $region41: #{conv_forward.2} parent=35 // loop_footer
                %s173 = sadd.s32 1, %s169
              $region42: #{conv_forward.2} parent=35 // loop_footer_branch
                %168 = sbr.rel target = $region38
              $region43: #{conv_forward.2} parent=35 // loop_exit
                _
            $region36: #{conv_forward.2} parent=27 // pred_fallthru
              _
          $region28: #{conv_forward.2} parent=23 // pred_fallthru
            _
          %216 = vnop
        $region24: #{conv_forward.2} parent=19 // pred_fallthru
          _
      $region20: #{conv_forward.2} parent=5 // pred_fallthru
        _
      %p217 = scmp.le.s32.totalorder 1, %s10
      %p218 = scmp.lt.s32.totalorder %s10, 5
      %p219 = pnand %p217, %p218
      %p220 = pneg %p219
      // Predicated region
      $region62: #{conv_forward.2} parent=5 // pred_check
        _
      $region63: #{conv_forward.2} parent=5 // pred_check_branch
        %222 = sbr.rel (%p219) target = $region65
      $region64: #{conv_forward.2} parent=5 // pred_region
        %s223 = ssub.s32 %s10, 1
        %s224 = sand.u32 %s37, 1
        %s225 = sand.u32 %s37, 1
        %s226 = smul.addr %s225, 20
        %s227 = scalar_lea.vmem [#allocation2], %s226
        // Predicated region
        $region66: #{conv_forward.2} parent=64 // pred_check
          %p228 = pneg %p50
        $region67: #{conv_forward.2} parent=64 // pred_check_branch
          %230 = sbr.rel (%p228) target = $region69
        $region68: #{conv_forward.2} parent=64 // pred_region
          _
        $region69: #{conv_forward.2} parent=64 // pred_fallthru
          _
        %s231 = sand.u32 %s37, 1
        %s232 = sand.u32 %s37, 1
        %s233 = smul.addr %s232, 20
        %s234 = scalar_lea.vmem [#allocation2], %s233
        %p235 = pneg %p50
        %p236 = pneg %p47
        %p237 = pneg %p71
        %p238 = pneg %p68
        %p239 = pneg %p99
        %p240 = pneg %p96
        %p241 = scmp.lt.s32.totalorder %s19, 1
        %s242 = scalar_select %p241, %s19, 1
        %p243 = scmp.lt.s32.totalorder %s20, 1
        %s244 = scalar_select %p243, %s20, 1
        %s245 = smul.addr %s242, 2
        %s246 = sadd.s32 %s244, %s245
        %s247 = smul.addr %s246, 8
        %s248 = scalar_lea.vmem %s2, %s247
        %p249 = pneg %p127
        %p250 = pneg %p124
        %p251 = scmp.lt.s32.totalorder %s19, 1
        %s252 = scalar_select %p251, %s19, 1
        %p253 = scmp.lt.s32.totalorder %s20, 1
        %s254 = scalar_select %p253, %s20, 1
        %s255 = smul.addr %s252, 2
        %s256 = sadd.s32 %s254, %s255
        %s257 = smul.addr %s256, 8
        %s258 = scalar_lea.vmem %s3, %s257
        %p259 = scmp.lt.s32.totalorder %s19, 1
        %s260 = scalar_select %p259, %s19, 1
        %p261 = scmp.lt.s32.totalorder %s20, 1
        %s262 = scalar_select %p261, %s20, 1
        %s263 = smul.addr %s260, 2
        %s264 = sadd.s32 %s262, %s263
        %s265 = smul.addr %s264, 8
        %s266 = scalar_lea.vmem %s2, %s265
        %p267 = scmp.lt.s32.totalorder %s19, 1
        %s268 = scalar_select %p267, %s19, 1
        %p269 = scmp.lt.s32.totalorder %s20, 1
        %s270 = scalar_select %p269, %s20, 1
        %s271 = smul.addr %s268, 2
        %s272 = sadd.s32 %s270, %s271
        %s273 = smul.addr %s272, 8
        %s274 = scalar_lea.vmem %s3, %s273
        %v276 = vld [vmem:[%s1] sm:$0xf]
        %v277 = vld [vmem:[%s227] sm:$0xf]
        %v278 = vld [vmem:[%s227 + $0x4] sm:$0xf]
        %v279 = vld [vmem:[%s227 + $0x8] sm:$0xf]
        %v280 = vld [vmem:[%s227 + $0xc] sm:$0xf]
        %v281 = vld [vmem:[%s227 + $0x10] sm:$0x3]
        %v287 = vunpack.c.l.b16 %v277
        %v288 = vunpack.c.l.b16 %v278
        %v289 = vunpack.c.l.b16 %v279
        %v290 = vunpack.c.l.b16 %v280
        %v291 = vunpack.c.l.b16 %v281
        %v292 = vpack.c.b16 %v288, %v287
        %v293 = vpack.c.b16 %v290, %v289
        %v294 = vpack.c.b16 %v291, %v291
        %vm297 = vcmask 293888
        %v299 = vsel %vm297, %v276, 0
        %vm301 = vcmask 1041408
        %v303 = vsel %vm301, %v294, 0
        %305 = vmatprep.subr.bf16.mxu0 0
        %306 = vmatpush1.bf16.msra.mxu0 0
        %307 = vmatprep.subr.bf16.mxu0 0
        %308 = vmatpush1.bf16.msra.mxu0 0
        %309 = vmatprep.subr.bf16.mxu0 0
        %310 = vmatpush1.bf16.msra.mxu0 0
        %311 = vmatprep.subr.bf16.mxu0 0
        %312 = vmatpush1.bf16.msra.mxu0 0
        %313 = vmatprep.subr.bf16.mxu0 0
        %314 = vmatpush1.bf16.msra.mxu0 0
        %315 = vmatprep.subr.bf16.mxu0 0
        %316 = vmatpush1.bf16.msra.mxu0 %v303
        %317 = vmatprep.subr.bf16.mxu0 0
        %318 = vmatpush1.bf16.msra.mxu0 %v293
        %319 = vmatprep.subr.bf16.mxu0 0
        %320 = vmatpush1.bf16.msra.mxu0 %v292
        %321 = vmatprep.subr.bf16.mxu0 0
        %322 = vmatpush2.bf16.msra.mxu0 0
        %323 = vmatprep.subr.bf16.mxu0 0
        %324 = vmatpush2.bf16.msra.mxu0 0
        %325 = vmatprep.subr.bf16.mxu0 0
        %326 = vmatpush2.bf16.msra.mxu0 0
        %327 = vmatprep.subr.bf16.mxu0 0
        %328 = vmatpush2.bf16.msra.mxu0 0
        %329 = vmatprep.subr.bf16.mxu0 0
        %330 = vmatpush2.bf16.msra.mxu0 0
        %331 = vmatprep.subr.bf16.mxu0 0
        %332 = vmatpush2.bf16.msra.mxu0 0
        %333 = vmatprep.subr.bf16.mxu0 0
        %334 = vmatpush2.bf16.msra.mxu0 0
        %335 = vmatprep.subr.bf16.mxu0 0
        %336 = vmatpush2.bf16.msra.mxu0 0
        %337 = vmatprep.mubr.bf16.mxu0 0
        %338 = vmatmul.mubr.bf16.gmra.mxu0 %v299
        %v339 = vpop.f32.mrf.mxu0
        %v340 = vadd.f32 0.0, %v339
        %v341 = vpop.f32.mrf.mxu0
        %v342 = vpop.f32.mrf.mxu0
        %v343 = vpop.f32.mrf.mxu0
        %344 = vdwg.mxu0
        %345 = vst [vmem:[%s266] sm:$0xff] %v340
        %346 = vadd.xlane.f32.xlu0 %v340
        %v347 = vpop.xlane.xlu0 %346
        %v348 = vmul.f32 %v340, %v340
        %349 = vadd.xlane.f32.xlu0 %v348
        %v350 = vpop.xlane.xlu0 %349
        %vm351 = vcmask 7168
        %v352 = vsel %vm351, %v347, %v350
        %vm353 = vcmask 15360
        %354 = vst.msk [vmem:[%s274] sm:$0xff] %vm353, %v352
        %p355 = scmp.lt.s32.totalorder %s19, 1
        %s356 = scalar_select %p355, %s19, 1
        %p357 = scmp.lt.s32.totalorder %s20, 1
        %s358 = scalar_select %p357, %s20, 1
        %s359 = smul.addr %s356, 2
        %s360 = sadd.s32 %s358, %s359
        %s361 = smul.addr %s360, 8
        %s362 = scalar_lea.vmem %s2, %s361
        %p363 = scmp.lt.s32.totalorder %s19, 1
        %s364 = scalar_select %p363, %s19, 1
        %p365 = scmp.lt.s32.totalorder %s20, 1
        %s366 = scalar_select %p365, %s20, 1
        %s367 = smul.addr %s364, 2
        %s368 = sadd.s32 %s366, %s367
        %s369 = smul.addr %s368, 8
        %s370 = scalar_lea.vmem %s3, %s369
        // Predicated region
        $region70: #{conv_forward.2} parent=64 // pred_check
          %p371 = pneg %p96
        $region71: #{conv_forward.2} parent=64 // pred_check_branch
          %373 = sbr.rel (%p371) target = $region73
        $region72: #{conv_forward.2} parent=64 // pred_region
          _
        $region73: #{conv_forward.2} parent=64 // pred_fallthru
          _
        // Predicated region
        $region74: #{conv_forward.2} parent=64 // pred_check
          %p374 = pneg %p124
        $region75: #{conv_forward.2} parent=64 // pred_check_branch
          %376 = sbr.rel (%p374) target = $region77
        $region76: #{conv_forward.2} parent=64 // pred_region
          _
        $region77: #{conv_forward.2} parent=64 // pred_fallthru
          _
      $region65: #{conv_forward.2} parent=5 // pred_fallthru
        _
      %p377 = scmp.le.s32.totalorder 2, %s10
      // Predicated region
      $region78: #{conv_forward.2} parent=5 // pred_check
        %p378 = pneg %p377
      $region79: #{conv_forward.2} parent=5 // pred_check_branch
        %380 = sbr.rel (%p378) target = $region81
      $region80: #{conv_forward.2} parent=5 // pred_region
        %s381 = ssub.s32 %s10, 2
        // Predicated region
        $region82: #{conv_forward.2} parent=80 // pred_check
          %p382 = pneg %p102
        $region83: #{conv_forward.2} parent=80 // pred_check_branch
          %384 = sbr.rel (%p382) target = $region85
        $region84: #{conv_forward.2} parent=80 // pred_region
          %p385 = scmp.lt.s32.totalorder %s21, 1
          %s386 = scalar_select %p385, %s21, 1
          %p387 = scmp.lt.s32.totalorder %s22, 1
          %s388 = scalar_select %p387, %s22, 1
          %s389 = smul.addr %s386, 2
          %s390 = sadd.s32 %s388, %s389
          %s391 = smul.addr %s390, 8
          %s392 = scalar_lea.vmem %s2, %s391
        $region85: #{conv_forward.2} parent=80 // pred_fallthru
          _
        // Predicated region
        $region86: #{conv_forward.2} parent=80 // pred_check
          %p393 = pneg %p130
        $region87: #{conv_forward.2} parent=80 // pred_check_branch
          %395 = sbr.rel (%p393) target = $region89
        $region88: #{conv_forward.2} parent=80 // pred_region
          %p396 = scmp.lt.s32.totalorder %s21, 1
          %s397 = scalar_select %p396, %s21, 1
          %p398 = scmp.lt.s32.totalorder %s22, 1
          %s399 = scalar_select %p398, %s22, 1
          %s400 = smul.addr %s397, 2
          %s401 = sadd.s32 %s399, %s400
          %s402 = smul.addr %s401, 8
          %s403 = scalar_lea.vmem %s3, %s402
        $region89: #{conv_forward.2} parent=80 // pred_fallthru
          _
      $region81: #{conv_forward.2} parent=5 // pred_fallthru
        _
    $region6: #{conv_forward.2} parent=1 // loop_footer
      %s14 = sadd.s32 1, %s10
    $region7: #{conv_forward.2} parent=1 // loop_footer_branch
      %9 = sbr.rel target = $region3
    $region8: #{conv_forward.2} parent=1 // loop_exit
      _

</llo_original>
